<compile_context>
chip_gen: v7x
topology: tpu7x:2x2x1
jax: 0.10.0
libtpu: 0.0.40
codegen_flags: <defaults>
</compile_context>

<pallas_src>
import functools

import numpy as np
import jax
import jax.numpy as jnp
from jax.experimental import pallas as pl
from jax.experimental.pallas import tpu as pltpu

BN_EPS = 1e-5
_MIB = 1024 * 1024


# ---------------------------------------------------------------------------
# Kernel 1: streaming token pooling (HBM-bandwidth-bound phase)
# ---------------------------------------------------------------------------
def _pool_kernel(emb_ref, cls_ref, mid_ref, *, S, tS, ns):
    s = pl.program_id(1)
    tile = emb_ref[...].astype(jnp.float32)          # (tB, tS, D), f32 accumulate

    @pl.when(s == 0)
    def _init():
        cls_ref[...] = tile[:, 0, :]                 # token 0 lives in seq-tile 0
        mid_ref[...] = jnp.zeros_like(mid_ref)

    if S % tS == 0:
        contrib = tile                               # full tile valid: unmasked sum
    else:
        tok = jax.lax.broadcasted_iota(jnp.int32, tile.shape, 1) + s * tS
        contrib = jnp.where(tok < S, tile, 0.0)      # mask padded tail tokens
    mid_ref[...] += jnp.sum(contrib, axis=1)

    @pl.when(s == ns - 1)
    def _finalize():
        last = tile[:, (S - 1) - (ns - 1) * tS, :]   # static within-tile index
        # mean over tokens 1..S-2 == (sum(all) - tok0 - tok_{S-1}) / (S-2)
        mid_ref[...] = (mid_ref[...] - cls_ref[...] - last) * (1.0 / (S - 2))


def _choose_pool_tiles(B, S, D, emb_itemsize, budget_bytes):
    """Largest seq tile whose double-buffered input block fits the VMEM budget."""
    tB = min(B, 32)
    resident = 4 * tB * D * 4 + (1 << 20)            # accumulator blocks + slack
    avail = max(budget_bytes - resident, 2 * tB * 8 * D * emb_itemsize)
    tS = int(avail // (2 * tB * D * emb_itemsize))
    if tS >= S:
        return tB, S                                 # full seq in one tile
    return tB, max(8, (tS // 8) * 8)                 # (8, .) sublane alignment


def _pool(embedding, *, vmem_budget_bytes=28 * _MIB):
    B, S, D = embedding.shape
    if S < 3:
        raise ValueError("ProtTransCNNv2 pooling needs S >= 3 "
                         "(cls token + >=1 word token + final token)")
    itemsize = jnp.dtype(embedding.dtype).itemsize
    tB, tS = _choose_pool_tiles(B, S, D, itemsize, vmem_budget_bytes)
    nb, ns = pl.cdiv(B, tB), pl.cdiv(S, tS)

    vmem_limit = int(min(2 * tB * tS * D * itemsize   # double-buffered input tile
                         + 4 * tB * D * 4             # resident output accumulators
                         + 8 * _MIB,                  # headroom for internal scratch
                         48 * _MIB))                  # safe on 64 MiB v7x VMEM

    kernel = functools.partial(_pool_kernel, S=S, tS=tS, ns=ns)
    grid_spec = pltpu.PrefetchScalarGridSpec(
        num_scalar_prefetch=0,
        grid=(nb, ns),
        in_specs=[pl.BlockSpec((tB, tS, D), lambda b, s: (b, s, 0))],
        out_specs=[pl.BlockSpec((tB, D), lambda b, s: (b, 0)),
                   pl.BlockSpec((tB, D), lambda b, s: (b, 0))],
    )
    cost = pl.CostEstimate(
        flops=int(B * S * D),
        transcendentals=0,
        bytes_accessed=int(B * S * D * itemsize + 2 * B * D * 4),
    )
    return pl.pallas_call(
        kernel,
        grid_spec=grid_spec,
        out_shape=(jax.ShapeDtypeStruct((B, D), jnp.float32),
                   jax.ShapeDtypeStruct((B, D), jnp.float32)),
        compiler_params=pltpu.CompilerParams(
            dimension_semantics=("parallel", "arbitrary"),
            vmem_limit_bytes=vmem_limit),
        cost_estimate=cost,
    )(embedding)


# ---------------------------------------------------------------------------
# Kernel 2: BatchNorm (batch statistics) + fc_start + ReLU + fc_last
# ---------------------------------------------------------------------------
def _head_kernel(cls_ref, mid_ref,
                 gc_ref, gm_ref, bc_ref, bm_ref,
                 w1c_ref, w1m_ref, b1_ref, w2_ref, b2_ref,
                 out_ref):
    def bn(x, gamma, beta):
        mu = jnp.mean(x, axis=0, keepdims=True)
        var = jnp.mean((x - mu) ** 2, axis=0, keepdims=True)   # biased variance
        return gamma * (x - mu) * jax.lax.rsqrt(var + BN_EPS) + beta

    cls_n = bn(cls_ref[...], gc_ref[...], bc_ref[...])         # (B, D)
    mid_n = bn(mid_ref[...], gm_ref[...], bm_ref[...])         # (B, D)

    # concat([cls, mid]) @ W1  ==  cls @ W1[:D] + mid @ W1[D:]
    h = (jnp.dot(cls_n, w1c_ref[...], preferred_element_type=jnp.float32)
         + jnp.dot(mid_n, w1m_ref[...], preferred_element_type=jnp.float32)
         + b1_ref[...].astype(jnp.float32))
    h = jnp.maximum(h, 0.0)                                    # ReLU
    y = jnp.dot(h, w2_ref[...], preferred_element_type=jnp.float32)
    out_ref[...] = (y + b2_ref[...].astype(jnp.float32)).astype(out_ref.dtype)


def _round_up(x, m):
    return ((x + m - 1) // m) * m


def _head(cls_f32, mid_f32, params):
    B, D = cls_f32.shape
    w1c, w1m, b1 = params["w1_cls"], params["w1_mid"], params["b1"]
    w2, b2 = params["w2"], params["b2"]
    H, out_dim = w2.shape

    # Zero-pad H / out_dim to multiples of 128 -> lane-dense MXU, unmasked stores.
    Hp, Op = _round_up(H, 128), _round_up(out_dim, 128)
    w1c_p = jnp.pad(w1c, ((0, 0), (0, Hp - H)))
    w1m_p = jnp.pad(w1m, ((0, 0), (0, Hp - H)))
    b1_p = jnp.pad(b1, ((0, 0), (0, Hp - H)))
    w2_p = jnp.pad(w2, ((0, Hp - H), (0, Op - out_dim)))
    b2_p = jnp.pad(b2, ((0, 0), (0, Op - out_dim)))

    operands = (cls_f32, mid_f32,
                params["gamma_cls"], params["gamma_mid"],
                params["beta_cls"], params["beta_mid"],
                w1c_p, w1m_p, b1_p, w2_p, b2_p)
    operand_bytes = sum(int(np.prod(a.shape)) * jnp.dtype(a.dtype).itemsize
                        for a in operands)
    vmem_limit = int(min(2 * operand_bytes + 2 * B * Op * 4 + 4 * _MIB, 48 * _MIB))

    vmem = pl.BlockSpec(memory_space=pltpu.MemorySpace.VMEM)
    cost = pl.CostEstimate(
        flops=int(2 * B * 2 * D * Hp + 2 * B * Hp * Op),
        transcendentals=int(4 * D),
        bytes_accessed=int(operand_bytes + B * Op * 4),
    )
    out_p = pl.pallas_call(
        _head_kernel,
        out_shape=jax.ShapeDtypeStruct((B, Op), jnp.float32),
        in_specs=[vmem] * len(operands),
        out_specs=vmem,
        compiler_params=pltpu.CompilerParams(vmem_limit_bytes=vmem_limit),
        cost_estimate=cost,
    )(*operands)
    return out_p[:, :out_dim]


# ---------------------------------------------------------------------------
# Public forward
# ---------------------------------------------------------------------------
def prottrans_cnn_v2_forward(embedding, params, *, stream_dtype=None):
    """embedding: (B, S, D).  Optionally stream it in a narrower dtype
    (e.g. jnp.bfloat16) to halve HBM traffic; accumulation stays f32."""
    if stream_dtype is not None:
        embedding = embedding.astype(stream_dtype)
    cls_f32, mid_f32 = _pool(embedding)
    return _head(cls_f32, mid_f32, params)


# ---------------------------------------------------------------------------
# Synthetic params + pure-JAX reference (for verification)
# ---------------------------------------------------------------------------
def make_params(D, H, out_dim, key):
    """Kaiming-normal weights, PyTorch-style uniform biases, BN gamma=1/beta=0."""
    feat = 2 * D
    k1, k2, k3, k4 = jax.random.split(key, 4)
    w1 = jax.random.normal(k1, (feat, H), jnp.float32) * np.sqrt(2.0 / feat)
    b1 = jax.random.uniform(k2, (1, H), jnp.float32,
                            minval=-1.0 / np.sqrt(feat), maxval=1.0 / np.sqrt(feat))
    w2 = jax.random.normal(k3, (H, out_dim), jnp.float32) * np.sqrt(2.0 / H)
    b2 = jax.random.uniform(k4, (1, out_dim), jnp.float32,
                            minval=-1.0 / np.sqrt(H), maxval=1.0 / np.sqrt(H))
    gamma = jnp.ones((1, feat), jnp.float32)
    beta = jnp.zeros((1, feat), jnp.float32)
    return {
        "gamma_cls": gamma[:, :D], "gamma_mid": gamma[:, D:],
        "beta_cls": beta[:, :D], "beta_mid": beta[:, D:],
        "w1_cls": w1[:D, :], "w1_mid": w1[D:, :], "b1": b1,
        "w2": w2, "b2": b2,
        # un-split copies for the pure-JAX reference
        "_gamma": gamma, "_beta": beta, "_w1": w1,
    }


def reference_forward(embedding, params):
    """Pure-JAX mirror of the PyTorch forward."""
    B, S, D = embedding.shape
    cls = embedding[:, 0, :]
    mid = jnp.mean(embedding[:, 1:S - 1, :], axis=1)
    x = jnp.concatenate([cls, mid], axis=1)            # (B, 2D)
    mu = jnp.mean(x, axis=0, keepdims=True)
    var = jnp.mean((x - mu) ** 2, axis=0, keepdims=True)
    x = params["_gamma"] * (x - mu) / jnp.sqrt(var + BN_EPS) + params["_beta"]
    h = jnp.maximum(x @ params["_w1"] + params["b1"], 0.0)
    return h @ params["w2"] + params["b2"]


if __name__ == "__main__":
    # Small shapes consistent with the module (real model: D=1024 -> BN(2048)).
    B, S, D = 2, 8, 16
    H, OUT = 32, 8

    key = jax.random.PRNGKey(0)
    k_emb, k_par = jax.random.split(key)
    embedding = jax.random.normal(k_emb, (B, S, D), jnp.float32)
    params = make_params(D, H, OUT, k_par)

    # --- f32 streaming path --------------------------------------------------
    out = jax.block_until_ready(prottrans_cnn_v2_forward(embedding, params))
    ref = reference_forward(embedding, params)
    assert out.shape == (B, OUT)
    np.testing.assert_allclose(np.asarray(out), np.asarray(ref),
                               rtol=1e-3, atol=1e-3)

    # --- bf16 streaming path (halved HBM traffic; f32 accumulation) ----------
    out_bf = jax.block_until_ready(
        prottrans_cnn_v2_forward(embedding, params, stream_dtype=jnp.bfloat16))
    ref_bf = reference_forward(
        embedding.astype(jnp.bfloat16).astype(jnp.float32), params)
    np.testing.assert_allclose(np.asarray(out_bf), np.asarray(ref_bf),
                               rtol=1e-2, atol=1e-2)

    print("KERNEL_OK")
</pallas_src>

<mosaic_0001>
module attributes {stable_mosaic.version = 11 : i64} {
  func.func @_pool_kernel(%arg0: i32, %arg1: i32, %arg2: memref<2x8x16xf32, #tpu.memory_space<vmem>>, %arg3: memref<2x16xf32, #tpu.memory_space<vmem>>, %arg4: memref<2x16xf32, #tpu.memory_space<vmem>>) attributes {dimension_semantics = [#tpu.dimension_semantics<parallel>, #tpu.dimension_semantics<arbitrary>], iteration_bounds = array<i64: 1, 1>, scalar_prefetch = 0 : i64, scratch_operands = 0 : i64, tpu.core_type = #tpu.core_type<tc>, window_params = [{transform_indices = @transform_0, window_bounds = array<i64: 2, 8, 16>}, {transform_indices = @transform_1, window_bounds = array<i64: 2, 16>}, {transform_indices = @transform_2, window_bounds = array<i64: 2, 16>}]} {
    %c0 = arith.constant 0 : index
    %c0_0 = arith.constant 0 : index
    %c0_1 = arith.constant 0 : index
    %0 = vector.load %arg2[%c0, %c0_0, %c0_1] : memref<2x8x16xf32, #tpu.memory_space<vmem>>, vector<2x8x16xf32>
    %c0_i32 = arith.constant 0 : i32
    %1 = arith.cmpi eq, %arg1, %c0_i32 : i32
    %2 = arith.extui %1 : i1 to i32
    %c0_i32_2 = arith.constant 0 : i32
    %3 = arith.cmpi ne, %2, %c0_i32_2 : i32
    scf.if %3 {
      %11 = vector.extract_strided_slice %0 {offsets = [0, 0, 0], sizes = [2, 1, 16], strides = [1, 1, 1]} : vector<2x8x16xf32> to vector<2x1x16xf32>
      %12 = vector.shape_cast %11 : vector<2x1x16xf32> to vector<2x16xf32>
      %c0_9 = arith.constant 0 : index
      %c0_10 = arith.constant 0 : index
      %13 = vector.load %arg3[%c0_9, %c0_10] : memref<2x16xf32, #tpu.memory_space<vmem>>, vector<2x16xf32>
      tpu.vector_store %arg3[%c0_9, %c0_10], %12 {strides = array<i32>} : memref<2x16xf32, #tpu.memory_space<vmem>>, vector<2x16xf32>,
      %cst_11 = arith.constant 0.000000e+00 : f32
      %14 = vector.broadcast %cst_11 : f32 to vector<2x16xf32>
      %c0_12 = arith.constant 0 : index
      %c0_13 = arith.constant 0 : index
      %15 = vector.load %arg4[%c0_12, %c0_13] : memref<2x16xf32, #tpu.memory_space<vmem>>, vector<2x16xf32>
      tpu.vector_store %arg4[%c0_12, %c0_13], %14 {strides = array<i32>} : memref<2x16xf32, #tpu.memory_space<vmem>>, vector<2x16xf32>,
    } else {
    }
    %c0_3 = arith.constant 0 : index
    %c0_4 = arith.constant 0 : index
    %4 = vector.load %arg4[%c0_3, %c0_4] : memref<2x16xf32, #tpu.memory_space<vmem>>, vector<2x16xf32>
    %cst = arith.constant dense<0.000000e+00> : vector<2x16xf32>
    %5 = vector.multi_reduction <add>, %0, %cst [1] : vector<2x8x16xf32> to vector<2x16xf32>
    %6 = arith.addf %4, %5 : vector<2x16xf32>
    %c0_5 = arith.constant 0 : index
    %c0_6 = arith.constant 0 : index
    %7 = vector.load %arg4[%c0_5, %c0_6] : memref<2x16xf32, #tpu.memory_space<vmem>>, vector<2x16xf32>
    tpu.vector_store %arg4[%c0_5, %c0_6], %6 {strides = array<i32>} : memref<2x16xf32, #tpu.memory_space<vmem>>, vector<2x16xf32>,
    %c0_i32_7 = arith.constant 0 : i32
    %8 = arith.cmpi eq, %arg1, %c0_i32_7 : i32
    %9 = arith.extui %8 : i1 to i32
    %c0_i32_8 = arith.constant 0 : i32
    %10 = arith.cmpi ne, %9, %c0_i32_8 : i32
    scf.if %10 {
      %11 = vector.extract_strided_slice %0 {offsets = [0, 7, 0], sizes = [2, 1, 16], strides = [1, 1, 1]} : vector<2x8x16xf32> to vector<2x1x16xf32>
      %12 = vector.shape_cast %11 : vector<2x1x16xf32> to vector<2x16xf32>
      %c0_9 = arith.constant 0 : index
      %c0_10 = arith.constant 0 : index
      %13 = vector.load %arg4[%c0_9, %c0_10] : memref<2x16xf32, #tpu.memory_space<vmem>>, vector<2x16xf32>
      %c0_11 = arith.constant 0 : index
      %c0_12 = arith.constant 0 : index
      %14 = vector.load %arg3[%c0_11, %c0_12] : memref<2x16xf32, #tpu.memory_space<vmem>>, vector<2x16xf32>
      %15 = arith.subf %13, %14 : vector<2x16xf32>
      %16 = arith.subf %15, %12 : vector<2x16xf32>
      %cst_13 = arith.constant 0.166666672 : f32
      %17 = vector.broadcast %cst_13 : f32 to vector<2x16xf32>
      %18 = arith.mulf %16, %17 : vector<2x16xf32>
      %c0_14 = arith.constant 0 : index
      %c0_15 = arith.constant 0 : index
      %19 = vector.load %arg4[%c0_14, %c0_15] : memref<2x16xf32, #tpu.memory_space<vmem>>, vector<2x16xf32>
      tpu.vector_store %arg4[%c0_14, %c0_15], %18 {strides = array<i32>} : memref<2x16xf32, #tpu.memory_space<vmem>>, vector<2x16xf32>,
    } else {
    }
    return
  }
  func.func @transform_0(%arg0: i32, %arg1: i32) -> (i32, i32, i32) {
    %c0_i32 = arith.constant 0 : i32
    %c0_i32_0 = arith.constant 0 : i32
    return %arg0, %arg1, %c0_i32 : i32, i32, i32
  }
  func.func @transform_1(%arg0: i32, %arg1: i32) -> (i32, i32) {
    %c0_i32 = arith.constant 0 : i32
    %c0_i32_0 = arith.constant 0 : i32
    return %arg0, %c0_i32 : i32, i32
  }
  func.func @transform_2(%arg0: i32, %arg1: i32) -> (i32, i32) {
    %c0_i32 = arith.constant 0 : i32
    %c0_i32_0 = arith.constant 0 : i32
    return %arg0, %c0_i32 : i32, i32
  }
}

</mosaic_0001>

<llo_original>
// kernel: tpu_custom_call.1
$region0: #{tpu_custom_call.1}
  #allocation0 [shape = 'u32[]', space=smem, size = 0x4, offset = 0x4, fixed_abs, tag = 'smem constant byte address 0x4 - core index']
  #allocation1 [shape = 'u32[144,128]{1,0:T(1,128)}', space=vmem, size = 0x12000, scoped, tag = 'internal scratch']
  %s0 = inlined_call_operand.hbm [shape: f32[2,8,16], index: 0, kind: input, shape index: {}]
  %s1 = inlined_call_operand.hbm [shape: f32[2,16], index: 1, kind: output, shape index: {0}]
  %s2 = inlined_call_operand.hbm [shape: f32[2,16], index: 2, kind: output, shape index: {1}]
  %3 = xla_tuple %s1, %s2
  %s4 = sld [smem:[#allocation0]]
  $region34: #{tpu_custom_call.1} parent=0
    _
  %s6 = ssub.s32 1, %s4
  %s7 = scalar_select 0, %s6, %s4
  $region1: #{tpu_custom_call.1} parent=0
    #allocation2 [shape = 'u8[8192]{0}', space=vmem, size = 0x2000, scoped, tag = 'input window, operand 0, single buffered']
    #allocation3 [shape = 's32[1]{0}', space=sflag, size = 0x4, scoped, tag = 'scoped memory for tpu_custom_call.1']
    #allocation4 [shape = 's32[1]{0}', space=sflag, size = 0x4, scoped, tag = 'scoped memory for tpu_custom_call.1']
    #allocation5 [shape = 'u8[1024]{0}', space=vmem, size = 0x400, scoped, tag = 'output window, operand 0, single buffered']
    #allocation6 [shape = 'u8[1024]{0}', space=vmem, size = 0x400, scoped, tag = 'output window, operand 1, single buffered']
    #allocation7 [shape = 's32[1]{0}', space=sflag, size = 0x4, scoped, tag = 'scoped memory for tpu_custom_call.1']
    %8 = vsyncpa [#allocation3], 0
    %9 = vsyncpa [#allocation4], 0
    %10 = vsyncpa [#allocation7], 0
    // Predicated region
    $region2: #{tpu_custom_call.1} parent=1 // pred_check
      _
    $region3: #{tpu_custom_call.1} parent=1 // pred_check_branch
      %12 = sbr.rel (0) target = $region5
    $region4: #{tpu_custom_call.1} parent=1 // pred_region
      %s14 = ssub.s32 256, 256
      %15 = vsyncadd [#allocation3], %s14
      %s16 = sshll.u32 [#allocation2], 4
      %s17 = int_to_ptr.vmem [resolvable:$true] %s16
      %22 = dma.hbm_to_vmem [thread:$0]  %s0, 256, %s17, [#allocation3], 128, 128, 8
    $region5: #{tpu_custom_call.1} parent=1 // pred_fallthru
      _
    // Predicated region
    $region6: #{tpu_custom_call.1} parent=1 // pred_check
      _
    $region7: #{tpu_custom_call.1} parent=1 // pred_check_branch
      %24 = sbr.rel (0) target = $region9
    $region8: #{tpu_custom_call.1} parent=1 // pred_region
      %25 = dma.done [#allocation3], 256
    $region9: #{tpu_custom_call.1} parent=1 // pred_fallthru
      _
    %v26 = vld [vmem:[#allocation2] sm:$0xff]
    %v27 = vld [vmem:[#allocation2 + $0x8] sm:$0xff]
    %p28 = scmp.eq.s32.totalorder 0, 0
    // Predicated region
    $region10: #{tpu_custom_call.1} parent=1 // pred_check
      %p29 = pneg %p28
    $region11: #{tpu_custom_call.1} parent=1 // pred_check_branch
      %31 = sbr.rel (%p29) target = $region13
    $region12: #{tpu_custom_call.1} parent=1 // pred_region
      %v34 = vrot.slane %v27, 7
      %vm35 = vcmask 1041409
      %v36 = vsel %vm35, %v34, %v26
      %vm38 = vcmask 123904
      %39 = vst.msk [vmem:[#allocation5] sm:$0x3] %vm38, %v36
      %40 = vst.msk [vmem:[#allocation6] sm:$0x3] %vm38, 0.0
    $region13: #{tpu_custom_call.1} parent=1 // pred_fallthru
      _
    %v41 = vld [vmem:[#allocation6] sm:$0x3]
    %vm42 = vcmask 130048
    %v43 = vsel %vm42, %v26, 0.0
    %v44 = vrot.slane %v43, 4
    %v45 = vadd.f32 %v43, %v44
    %v46 = vrot.slane %v45, 2
    %v47 = vadd.f32 %v45, %v46
    %v48 = vrot.slane %v47, 1
    %v49 = vadd.f32 %v47, %v48
    %v50 = vsel %vm42, %v27, 0.0
    %v51 = vrot.slane %v50, 4
    %v52 = vadd.f32 %v50, %v51
    %v53 = vrot.slane %v52, 2
    %v54 = vadd.f32 %v52, %v53
    %v55 = vrot.slane %v54, 1
    %v56 = vadd.f32 %v54, %v55
    %vm59 = vcmask 1041409
    %v60 = vsel %vm59, %v56, %v49
    %v62 = vadd.f32 %v41, %v60
    %vm63 = vcmask 123904
    %64 = vst.msk [vmem:[#allocation6] sm:$0x3] %vm63, %v62
    // Predicated region
    $region14: #{tpu_custom_call.1} parent=1 // pred_check
      %p65 = pneg %p28
    $region15: #{tpu_custom_call.1} parent=1 // pred_check_branch
      %67 = sbr.rel (%p65) target = $region17
    $region16: #{tpu_custom_call.1} parent=1 // pred_region
      %v68 = vld [vmem:[#allocation6] sm:$0x3]
      %v69 = vld [vmem:[#allocation5] sm:$0x3]
      %v70 = vsub.f32 %v68, %v69
      %v73 = vrot.slane %v26, 7
      %v74 = vrot.slane %v27, 6
      %v75 = vsel %vm59, %v74, %v73
      %v77 = vsub.f32 %v70, %v75
      %v78 = vmul.f32 %v77, 0.16666667
      %79 = vst.msk [vmem:[#allocation6] sm:$0x3] %vm63, %v78
    $region17: #{tpu_custom_call.1} parent=1 // pred_fallthru
      _
    // Predicated region
    $region18: #{tpu_custom_call.1} parent=1 // pred_check
      _
    $region19: #{tpu_custom_call.1} parent=1 // pred_check_branch
      %81 = sbr.rel (0) target = $region21
    $region20: #{tpu_custom_call.1} parent=1 // pred_region
      %s83 = ssub.s32 32, 32
      %84 = vsyncadd [#allocation4], %s83
      %s86 = sshll.u32 [#allocation5], 4
      %s87 = int_to_ptr.vmem [resolvable:$true] %s86
      %89 = dma.vmem_to_hbm [thread:$0]  %s87, 32, %s1, [#allocation4]
    $region21: #{tpu_custom_call.1} parent=1 // pred_fallthru
      _
    // Predicated region
    $region22: #{tpu_custom_call.1} parent=1 // pred_check
      _
    $region23: #{tpu_custom_call.1} parent=1 // pred_check_branch
      %91 = sbr.rel (0) target = $region25
    $region24: #{tpu_custom_call.1} parent=1 // pred_region
      %s93 = ssub.s32 32, 32
      %94 = vsyncadd [#allocation7], %s93
      %s96 = sshll.u32 [#allocation6], 4
      %s97 = int_to_ptr.vmem [resolvable:$true] %s96
      %99 = dma.vmem_to_hbm [thread:$0]  %s97, 32, %s2, [#allocation7]
    $region25: #{tpu_custom_call.1} parent=1 // pred_fallthru
      _
    // Predicated region
    $region26: #{tpu_custom_call.1} parent=1 // pred_check
      _
    $region27: #{tpu_custom_call.1} parent=1 // pred_check_branch
      %101 = sbr.rel (0) target = $region29
    $region28: #{tpu_custom_call.1} parent=1 // pred_region
      %102 = dma.done [#allocation4], 32
    $region29: #{tpu_custom_call.1} parent=1 // pred_fallthru
      _
    // Predicated region
    $region30: #{tpu_custom_call.1} parent=1 // pred_check
      _
    $region31: #{tpu_custom_call.1} parent=1 // pred_check_branch
      %104 = sbr.rel (0) target = $region33
    $region32: #{tpu_custom_call.1} parent=1 // pred_region
      %105 = dma.done [#allocation7], 32
    $region33: #{tpu_custom_call.1} parent=1 // pred_fallthru
      _
    %106 = vsyncpa [#allocation3], 1
    %107 = vsyncpa [#allocation4], 1
    %108 = vsyncpa [#allocation7], 1

</llo_original>
